<compile_context>
chip_gen: v5e
topology: v5e:2x2
jax: 0.10.0
libtpu: 0.0.40
codegen_flags: <defaults>
</compile_context>

<pallas_src>
import functools

import jax
import jax.numpy as jnp
from jax import lax
from jax.experimental import pallas as pl
from jax.experimental.pallas import tpu as pltpu


def _round_up(v, m):
    return (v + m - 1) // m * m


def _con_proximity_kernel(x_ref, c_ref, c2_ref, lab_ref, sum_ref, cnt_ref,
                          x2_ref, *, tm, tc, num_classes, mask_rows,
                          mask_cols, use_bf16_dot):
    j = pl.program_id(1)  # class-tile index (reduction axis, innermost)

    @pl.when(j == 0)
    def _init():
        # Per-batch-tile init: squared row norms + zeroed output accumulators.
        xb = x_ref[...]
        x2_ref[...] = jnp.sum(xb * xb, axis=1, keepdims=True)
        sum_ref[...] = jnp.zeros_like(sum_ref)
        cnt_ref[...] = jnp.zeros_like(cnt_ref)

    x = x_ref[...]          # (tm, D) f32 batch tile (partial tail rows masked)
    c = c_ref[...]          # (tc, D) f32 centers tile
    c2 = c2_ref[...]        # (1, tc) f32 precomputed ||c_j||^2 row
    labels = lab_ref[...]   # (tm, 1) int32 (-1 marks padded rows)

    if use_bf16_dot:
        dot = lax.dot_general(x.astype(jnp.bfloat16), c.astype(jnp.bfloat16),
                              dimension_numbers=(((1,), (1,)), ((), ())),
                              preferred_element_type=jnp.float32)
    else:
        dot = lax.dot_general(x, c,
                              dimension_numbers=(((1,), (1,)), ((), ())),
                              preferred_element_type=jnp.float32)

    # ||x_i||^2 + ||c_j||^2 - 2 x_i . c_j   (matches distmat + addmm_)
    distmat = x2_ref[...] + c2 - 2.0 * dot                      # (tm, tc)

    classes = lax.broadcasted_iota(jnp.int32, (tm, tc), 1)      # local class id
    same = (labels - j * tc) == classes                         # label == class

    dist_ = jnp.where(same, 0.0, distmat)
    clipped = jnp.clip(dist_, 1e-12, 1e12)
    nz = dist_ != 0.0

    # Padding masks (statically compiled out when shapes divide evenly).
    valid = None
    if mask_rows:
        valid = labels >= 0                                     # (tm, 1)
    if mask_cols:
        col_ok = classes < (num_classes - j * tc)               # (tm, tc)
        valid = col_ok if valid is None else jnp.logical_and(valid, col_ok)

    if valid is not None:
        contrib = jnp.where(valid, clipped, 0.0)
        counted = jnp.logical_and(nz, valid)
    else:
        contrib = clipped
        counted = nz
    counted = counted.astype(jnp.int32)

    # Fold sublane tiles: (tm, tc) -> (8, tc) via static 8-row slices and
    # elementwise adds (pure vreg adds, no cross-lane XLU work).
    part_s = contrib[0:8, :]
    part_c = counted[0:8, :]
    for r in range(1, tm // 8):
        rs = slice(r * 8, (r + 1) * 8)
        part_s = part_s + contrib[rs, :]
        part_c = part_c + counted[rs, :]

    # Fold lane tiles into the (8, 128) output accumulators.
    acc_s = sum_ref[0]
    acc_c = cnt_ref[0]
    for k in range(tc // 128):
        ks = slice(k * 128, (k + 1) * 128)
        acc_s = acc_s + part_s[:, ks]
        acc_c = acc_c + part_c[:, ks]
    sum_ref[0] = acc_s
    cnt_ref[0] = acc_c


def _pick_tiles(B, D, c_pad, tm_req, tc_req):
    # Batch tile: sublane multiple of 8, no larger than the (rounded-up) batch.
    tm = min(tm_req, _round_up(B, 8))
    tm = max(8, _round_up(tm, 8))

    # Class tile: multiple of 128 dividing the padded class count.
    tc = max(128, min(tc_req, c_pad))
    tc = (tc // 128) * 128
    while c_pad % tc:
        tc -= 128

    def est(tm_, tc_):
        x_buf = 2 * tm_ * D * 4          # x tile, double-buffered
        c_buf = 2 * tc_ * D * 4          # centers tile, double-buffered
        c2_buf = 2 * tc_ * 4
        lab_buf = 2 * tm_ * 4
        x2_scr = tm_ * 4
        out_buf = 2 * 2 * 8 * 128 * 4
        temps = 8 * tm_ * tc_ * 4        # distmat + elementwise temporaries
        return x_buf + c_buf + c2_buf + lab_buf + x2_scr + out_buf + temps

    budget = 48 << 20                    # headroom under v7x's 64 MiB VMEM
    while est(tm, tc) > budget and tm > 8:
        tm = max(8, _round_up(tm // 2, 8))
    while est(tm, tc) > budget and tc > 128:
        tc -= 128
        while c_pad % tc:
            tc -= 128
    return tm, tc, est(tm, tc)


def con_proximity(x, centers, labels, *, tm=512, tc=512, use_bf16_dot=False):
    """Pallas forward of Con_Proximity. Returns a scalar f32 loss."""
    B, D = x.shape
    C, Dc = centers.shape
    assert D == Dc

    x = x.astype(jnp.float32)
    centers = centers.astype(jnp.float32)
    labels = labels.astype(jnp.int32)

    c_pad = _round_up(C, 128)
    tm, tc, est = _pick_tiles(B, D, c_pad, tm, tc)

    nb = (B + tm - 1) // tm
    nc = c_pad // tc
    mask_rows = (B % tm) != 0        # partial last batch tile (garbage rows)
    mask_cols = (c_pad != C)         # zero-padded class columns

    # Centers padding (small, one-time); ||c||^2 precomputed as a lane-dense
    # row so the kernel never reduces/transposes the centers tile.
    if c_pad != C:
        centers_p = jnp.zeros((c_pad, D), jnp.float32).at[:C].set(centers)
    else:
        centers_p = centers
    c2 = jnp.sum(centers_p * centers_p, axis=1)[None, :]        # (1, c_pad)

    # Labels padded with -1: -1 rows are masked out inside the kernel, so x
    # itself never needs a padded HBM copy.
    lab_p = jnp.full((nb * tm, 1), -1, jnp.int32).at[:B, 0].set(labels)

    kernel = functools.partial(
        _con_proximity_kernel, tm=tm, tc=tc, num_classes=C,
        mask_rows=mask_rows, mask_cols=mask_cols, use_bf16_dot=use_bf16_dot)

    vmem_limit = int(min(max(2 * est, 32 << 20), 64 << 20))

    part_sums, part_cnts = pl.pallas_call(
        kernel,
        out_shape=(jax.ShapeDtypeStruct((nb, 8, 128), jnp.float32),
                   jax.ShapeDtypeStruct((nb, 8, 128), jnp.int32)),
        grid_spec=pltpu.PrefetchScalarGridSpec(
            num_scalar_prefetch=0,
            grid=(nb, nc),                       # batch tiles x class tiles
            in_specs=[
                pl.BlockSpec((tm, D), lambda i, j: (i, 0)),      # x tile
                pl.BlockSpec((tc, D), lambda i, j: (j, 0)),      # centers tile
                pl.BlockSpec((1, tc), lambda i, j: (0, j)),      # ||c||^2 row
                pl.BlockSpec((tm, 1), lambda i, j: (i, 0)),      # labels tile
            ],
            out_specs=[
                pl.BlockSpec((1, 8, 128), lambda i, j: (i, 0, 0)),  # partial sums
                pl.BlockSpec((1, 8, 128), lambda i, j: (i, 0, 0)),  # partial counts
            ],
            scratch_shapes=[pltpu.VMEM((tm, 1), jnp.float32)],   # ||x_i||^2
        ),
        compiler_params=pltpu.CompilerParams(
            # Batch axis is embarrassingly parallel (per-tile partial outputs,
            # shardable across TensorCores on v7x); class axis is a reduction.
            dimension_semantics=("parallel", "arbitrary"),
            vmem_limit_bytes=vmem_limit,
        ),
    )(x, centers_p, c2, lab_p)

    total = jnp.sum(part_sums)
    count = jnp.sum(part_cnts)       # int32: exact up to 2**31 nonzero entries
    # count == 0 -> NaN, same as the PyTorch reference.
    return total / count.astype(jnp.float32)


def con_proximity_ref(x, centers, labels):
    """Pure-JAX reference mirroring the PyTorch forward exactly."""
    C = centers.shape[0]
    distmat = (jnp.sum(x ** 2, axis=1, keepdims=True)
               + jnp.sum(centers ** 2, axis=1)[None, :]
               - 2.0 * x @ centers.T)
    classes = jnp.arange(C, dtype=jnp.int32)
    mask = labels[:, None] == classes[None, :]
    dist_ = distmat * (~mask).astype(jnp.float32)
    count = jnp.sum(dist_ != 0.0)
    return jnp.sum(jnp.clip(dist_, 1e-12, 1e12)) / count


if __name__ == "__main__":
    # Module config: Con_Proximity(num_classes, feat_dim, dtype=float32, use_gpu=False)
    num_classes = 16
    feat_dim = 32
    batch = 8

    key = jax.random.PRNGKey(0)
    k_centers, k_x, k_lab = jax.random.split(key, 3)

    # Deterministic synthetic parameter (torch.randn(num_classes, feat_dim))
    centers = jax.random.normal(k_centers, (num_classes, feat_dim),
                                dtype=jnp.float32)

    # Inputs
    x = jax.random.normal(k_x, (batch, feat_dim), dtype=jnp.float32)
    labels = jax.random.randint(k_lab, (batch,), 0, num_classes,
                                dtype=jnp.int32)

    loss = con_proximity(x, centers, labels)
    jax.block_until_ready(loss)

    loss_ref = con_proximity_ref(x, centers, labels)
    assert jnp.allclose(loss, loss_ref, rtol=1e-5, atol=1e-5), (loss, loss_ref)

    print("KERNEL_OK")
</pallas_src>

<mosaic_0001>
module attributes {stable_mosaic.version = 11 : i64} {
  func.func @_con_proximity_kernel(%arg0: i32, %arg1: i32, %arg2: memref<8x32xf32, #tpu.memory_space<vmem>>, %arg3: memref<128x32xf32, #tpu.memory_space<vmem>>, %arg4: memref<1x128xf32, #tpu.memory_space<vmem>>, %arg5: memref<8x1xi32, #tpu.memory_space<vmem>>, %arg6: memref<1x8x128xf32, #tpu.memory_space<vmem>>, %arg7: memref<1x8x128xi32, #tpu.memory_space<vmem>>, %arg8: memref<8x1xf32, #tpu.memory_space<vmem>>) attributes {dimension_semantics = [#tpu.dimension_semantics<parallel>, #tpu.dimension_semantics<arbitrary>], iteration_bounds = array<i64: 1, 1>, scalar_prefetch = 0 : i64, scratch_operands = 1 : i64, tpu.core_type = #tpu.core_type<tc>, window_params = [{transform_indices = @transform_0, window_bounds = array<i64: 8, 32>}, {transform_indices = @transform_1, window_bounds = array<i64: 128, 32>}, {transform_indices = @transform_2, window_bounds = array<i64: 1, 128>}, {transform_indices = @transform_3, window_bounds = array<i64: 8, 1>}, {transform_indices = @transform_4, window_bounds = array<i64: 1, 8, 128>}, {transform_indices = @transform_5, window_bounds = array<i64: 1, 8, 128>}]} {
    %c0_i32 = arith.constant 0 : i32
    %0 = arith.cmpi eq, %arg1, %c0_i32 : i32
    %1 = arith.extui %0 : i1 to i32
    %c0_i32_0 = arith.constant 0 : i32
    %2 = arith.cmpi ne, %1, %c0_i32_0 : i32
    scf.if %2 {
      %c0_29 = arith.constant 0 : index
      %c0_30 = arith.constant 0 : index
      %49 = vector.load %arg2[%c0_29, %c0_30] : memref<8x32xf32, #tpu.memory_space<vmem>>, vector<8x32xf32>
      %50 = arith.mulf %49, %49 : vector<8x32xf32>
      %cst_31 = arith.constant dense<0.000000e+00> : vector<8xf32>
      %51 = vector.multi_reduction <add>, %50, %cst_31 [1] : vector<8x32xf32> to vector<8xf32>
      %52 = vector.shape_cast %51 : vector<8xf32> to vector<8x1xf32>
      %c0_32 = arith.constant 0 : index
      %c0_33 = arith.constant 0 : index
      %53 = vector.load %arg8[%c0_32, %c0_33] : memref<8x1xf32, #tpu.memory_space<vmem>>, vector<8x1xf32>
      tpu.vector_store %arg8[%c0_32, %c0_33], %52 {strides = array<i32>} : memref<8x1xf32, #tpu.memory_space<vmem>>, vector<8x1xf32>,
      %cst_34 = arith.constant 0.000000e+00 : f32
      %54 = vector.broadcast %cst_34 : f32 to vector<1x8x128xf32>
      %c0_35 = arith.constant 0 : index
      %c0_36 = arith.constant 0 : index
      %c0_37 = arith.constant 0 : index
      %55 = vector.load %arg6[%c0_35, %c0_36, %c0_37] : memref<1x8x128xf32, #tpu.memory_space<vmem>>, vector<1x8x128xf32>
      tpu.vector_store %arg6[%c0_35, %c0_36, %c0_37], %54 {strides = array<i32>} : memref<1x8x128xf32, #tpu.memory_space<vmem>>, vector<1x8x128xf32>,
      %c0_i32_38 = arith.constant 0 : i32
      %56 = vector.broadcast %c0_i32_38 : i32 to vector<1x8x128xi32>
      %c0_39 = arith.constant 0 : index
      %c0_40 = arith.constant 0 : index
      %c0_41 = arith.constant 0 : index
      %57 = vector.load %arg7[%c0_39, %c0_40, %c0_41] : memref<1x8x128xi32, #tpu.memory_space<vmem>>, vector<1x8x128xi32>
      tpu.vector_store %arg7[%c0_39, %c0_40, %c0_41], %56 {strides = array<i32>} : memref<1x8x128xi32, #tpu.memory_space<vmem>>, vector<1x8x128xi32>,
    } else {
    }
    %c0 = arith.constant 0 : index
    %c0_1 = arith.constant 0 : index
    %3 = vector.load %arg2[%c0, %c0_1] : memref<8x32xf32, #tpu.memory_space<vmem>>, vector<8x32xf32>
    %c0_2 = arith.constant 0 : index
    %c0_3 = arith.constant 0 : index
    %4 = vector.load %arg3[%c0_2, %c0_3] : memref<128x32xf32, #tpu.memory_space<vmem>>, vector<128x32xf32>
    %c0_4 = arith.constant 0 : index
    %c0_5 = arith.constant 0 : index
    %5 = vector.load %arg4[%c0_4, %c0_5] : memref<1x128xf32, #tpu.memory_space<vmem>>, vector<1x128xf32>
    %c0_6 = arith.constant 0 : index
    %c0_7 = arith.constant 0 : index
    %6 = vector.load %arg5[%c0_6, %c0_7] : memref<8x1xi32, #tpu.memory_space<vmem>>, vector<8x1xi32>
    %cst = arith.constant dense<0.000000e+00> : vector<8x128xf32>
    %7 = tpu.matmul %3, %4, %cst {dimension_numbers = #tpu.dot_dimension_numbers<[1], [1], [0], [0], [0, 0, 1, 0], [], []>} : vector<8x32xf32>, vector<128x32xf32>, vector<8x128xf32> -> vector<8x128xf32>
    %c0_8 = arith.constant 0 : index
    %c0_9 = arith.constant 0 : index
    %8 = vector.load %arg8[%c0_8, %c0_9] : memref<8x1xf32, #tpu.memory_space<vmem>>, vector<8x1xf32>
    %9 = vector.broadcast %8 : vector<8x1xf32> to vector<8x128xf32>
    %10 = vector.broadcast %5 : vector<1x128xf32> to vector<8x128xf32>
    %11 = arith.addf %9, %10 : vector<8x128xf32>
    %cst_10 = arith.constant 2.000000e+00 : f32
    %12 = vector.broadcast %cst_10 : f32 to vector<8x128xf32>
    %13 = arith.mulf %12, %7 : vector<8x128xf32>
    %14 = arith.subf %11, %13 : vector<8x128xf32>
    %15 = tpu.iota {dimensions = array<i32: 1>} : vector<8x128xi32>
    %c128_i32 = arith.constant 128 : i32
    %16 = arith.muli %arg1, %c128_i32 : i32
    %17 = vector.broadcast %16 : i32 to vector<8x1xi32>
    %18 = arith.subi %6, %17 : vector<8x1xi32>
    %19 = vector.broadcast %18 : vector<8x1xi32> to vector<8x128xi32>
    %20 = arith.cmpi eq, %19, %15 : vector<8x128xi32>
    %cst_11 = arith.constant 0.000000e+00 : f32
    %21 = vector.broadcast %cst_11 : f32 to vector<8x128xf32>
    %22 = arith.select %20, %21, %14 : vector<8x128xi1>, vector<8x128xf32>
    %cst_12 = arith.constant 9.99999996E-13 : f32
    %cst_13 = arith.constant 9.99999995E+11 : f32
    %23 = vector.broadcast %cst_12 : f32 to vector<8x128xf32>
    %24 = arith.maximumf %23, %22 : vector<8x128xf32>
    %25 = vector.broadcast %cst_13 : f32 to vector<8x128xf32>
    %26 = arith.minimumf %25, %24 : vector<8x128xf32>
    %cst_14 = arith.constant 0.000000e+00 : f32
    %27 = vector.broadcast %cst_14 : f32 to vector<8x128xf32>
    %28 = arith.cmpf one, %22, %27 : vector<8x128xf32>
    %c128_i32_15 = arith.constant 128 : i32
    %29 = arith.muli %arg1, %c128_i32_15 : i32
    %c16_i32 = arith.constant 16 : i32
    %30 = arith.subi %c16_i32, %29 : i32
    %31 = vector.broadcast %30 : i32 to vector<8x128xi32>
    %32 = arith.cmpi slt, %15, %31 : vector<8x128xi32>
    %cst_16 = arith.constant 0.000000e+00 : f32
    %33 = vector.broadcast %cst_16 : f32 to vector<8x128xf32>
    %34 = arith.select %32, %26, %33 : vector<8x128xi1>, vector<8x128xf32>
    %35 = arith.andi %28, %32 : vector<8x128xi1>
    %36 = arith.extui %35 : vector<8x128xi1> to vector<8x128xi32>
    %c0_17 = arith.constant 0 : index
    %c0_18 = arith.constant 0 : index
    %c0_19 = arith.constant 0 : index
    %37 = vector.load %arg6[%c0_17, %c0_18, %c0_19] : memref<1x8x128xf32, #tpu.memory_space<vmem>>, vector<1x8x128xf32>
    %38 = vector.shape_cast %37 : vector<1x8x128xf32> to vector<8x128xf32>
    %c0_20 = arith.constant 0 : index
    %c0_21 = arith.constant 0 : index
    %c0_22 = arith.constant 0 : index
    %39 = vector.load %arg7[%c0_20, %c0_21, %c0_22] : memref<1x8x128xi32, #tpu.memory_space<vmem>>, vector<1x8x128xi32>
    %40 = vector.shape_cast %39 : vector<1x8x128xi32> to vector<8x128xi32>
    %41 = arith.addf %38, %34 : vector<8x128xf32>
    %42 = arith.addi %40, %36 : vector<8x128xi32>
    %c0_23 = arith.constant 0 : index
    %c0_24 = arith.constant 0 : index
    %c0_25 = arith.constant 0 : index
    %43 = vector.load %arg6[%c0_23, %c0_24, %c0_25] : memref<1x8x128xf32, #tpu.memory_space<vmem>>, vector<1x8x128xf32>
    %44 = vector.shape_cast %43 : vector<1x8x128xf32> to vector<8x128xf32>
    %45 = vector.shape_cast %41 : vector<8x128xf32> to vector<1x8x128xf32>
    tpu.vector_store %arg6[%c0_23, %c0_24, %c0_25], %45 {strides = array<i32>} : memref<1x8x128xf32, #tpu.memory_space<vmem>>, vector<1x8x128xf32>,
    %c0_26 = arith.constant 0 : index
    %c0_27 = arith.constant 0 : index
    %c0_28 = arith.constant 0 : index
    %46 = vector.load %arg7[%c0_26, %c0_27, %c0_28] : memref<1x8x128xi32, #tpu.memory_space<vmem>>, vector<1x8x128xi32>
    %47 = vector.shape_cast %46 : vector<1x8x128xi32> to vector<8x128xi32>
    %48 = vector.shape_cast %42 : vector<8x128xi32> to vector<1x8x128xi32>
    tpu.vector_store %arg7[%c0_26, %c0_27, %c0_28], %48 {strides = array<i32>} : memref<1x8x128xi32, #tpu.memory_space<vmem>>, vector<1x8x128xi32>,
    return
  }
  func.func @transform_0(%arg0: i32, %arg1: i32) -> (i32, i32) {
    %c0_i32 = arith.constant 0 : i32
    %c0_i32_0 = arith.constant 0 : i32
    return %arg0, %c0_i32 : i32, i32
  }
  func.func @transform_1(%arg0: i32, %arg1: i32) -> (i32, i32) {
    %c0_i32 = arith.constant 0 : i32
    %c0_i32_0 = arith.constant 0 : i32
    return %arg1, %c0_i32 : i32, i32
  }
  func.func @transform_2(%arg0: i32, %arg1: i32) -> (i32, i32) {
    %c0_i32 = arith.constant 0 : i32
    %c0_i32_0 = arith.constant 0 : i32
    return %c0_i32, %arg1 : i32, i32
  }
  func.func @transform_3(%arg0: i32, %arg1: i32) -> (i32, i32) {
    %c0_i32 = arith.constant 0 : i32
    %c0_i32_0 = arith.constant 0 : i32
    return %arg0, %c0_i32 : i32, i32
  }
  func.func @transform_4(%arg0: i32, %arg1: i32) -> (i32, i32, i32) {
    %c0_i32 = arith.constant 0 : i32
    %c0_i32_0 = arith.constant 0 : i32
    %c0_i32_1 = arith.constant 0 : i32
    return %arg0, %c0_i32, %c0_i32_0 : i32, i32, i32
  }
  func.func @transform_5(%arg0: i32, %arg1: i32) -> (i32, i32, i32) {
    %c0_i32 = arith.constant 0 : i32
    %c0_i32_0 = arith.constant 0 : i32
    %c0_i32_1 = arith.constant 0 : i32
    return %arg0, %c0_i32, %c0_i32_0 : i32, i32, i32
  }
}

</mosaic_0001>

<llo_original>
// kernel: tpu_custom_call.1
$region0: #{tpu_custom_call.1}
  #allocation0 [shape = 'u32[]', space=smem, size = 0x4, offset = 0x4, fixed_abs, tag = 'smem constant byte address 0x4 - core index']
  #allocation1 [shape = 'u32[72,128]{1,0:T(1,128)}', space=vmem, size = 0x9000, scoped, tag = 'internal scratch']
  #allocation2 [shape = 'f32[8,1]{1,0:T(8,128)}', space=vmem, size = 0x1000, scoped, tag = 'scratch operand']
  %s0 = inlined_call_operand.vmem [shape: f32[8,32], index: 0, kind: input, shape index: {}]
  %s1 = inlined_call_operand.vmem [shape: f32[128,32], index: 1, kind: input, shape index: {}]
  %s2 = inlined_call_operand.vmem [shape: f32[1,128], index: 2, kind: input, shape index: {}]
  %s3 = inlined_call_operand.vmem [shape: s32[8,1], index: 3, kind: input, shape index: {}]
  %s4 = inlined_call_operand.hbm [shape: f32[1,8,128], index: 4, kind: output, shape index: {0}]
  %s5 = inlined_call_operand.hbm [shape: s32[1,8,128], index: 5, kind: output, shape index: {1}]
  %6 = xla_tuple %s4, %s5
  %s7 = sld [smem:[#allocation0]]
  $region38: #{tpu_custom_call.1} parent=0
    _
  %s9 = ssub.s32 1, %s7
  %s10 = scalar_select 0, %s9, %s7
  $region1: #{tpu_custom_call.1} parent=0
    #allocation3 [shape = 'u8[4096]{0}', space=vmem, size = 0x1000, scoped, tag = 'output window, operand 0, single buffered']
    #allocation4 [shape = 's32[1]{0}', space=sflag, size = 0x4, scoped, tag = 'scoped memory for tpu_custom_call.1']
    #allocation5 [shape = 'u8[4096]{0}', space=vmem, size = 0x1000, scoped, tag = 'output window, operand 1, single buffered']
    #allocation6 [shape = 's32[1]{0}', space=sflag, size = 0x4, scoped, tag = 'scoped memory for tpu_custom_call.1']
    %11 = vsyncpa [#allocation4], 0
    %12 = vsyncpa [#allocation6], 0
    // Predicated region
    $region2: #{tpu_custom_call.1} parent=1 // pred_check
      _
    $region3: #{tpu_custom_call.1} parent=1 // pred_check_branch
      %14 = sbr.rel (0) target = $region5
    $region4: #{tpu_custom_call.1} parent=1 // pred_region
      _
    $region5: #{tpu_custom_call.1} parent=1 // pred_fallthru
      _
    // Predicated region
    $region6: #{tpu_custom_call.1} parent=1 // pred_check
      _
    $region7: #{tpu_custom_call.1} parent=1 // pred_check_branch
      %16 = sbr.rel (0) target = $region9
    $region8: #{tpu_custom_call.1} parent=1 // pred_region
      _
    $region9: #{tpu_custom_call.1} parent=1 // pred_fallthru
      _
    // Predicated region
    $region10: #{tpu_custom_call.1} parent=1 // pred_check
      _
    $region11: #{tpu_custom_call.1} parent=1 // pred_check_branch
      %18 = sbr.rel (0) target = $region13
    $region12: #{tpu_custom_call.1} parent=1 // pred_region
      _
    $region13: #{tpu_custom_call.1} parent=1 // pred_fallthru
      _
    // Predicated region
    $region14: #{tpu_custom_call.1} parent=1 // pred_check
      _
    $region15: #{tpu_custom_call.1} parent=1 // pred_check_branch
      %20 = sbr.rel (0) target = $region17
    $region16: #{tpu_custom_call.1} parent=1 // pred_region
      _
    $region17: #{tpu_custom_call.1} parent=1 // pred_fallthru
      _
    %p21 = scmp.eq.s32.totalorder 0, 0
    // Predicated region
    $region18: #{tpu_custom_call.1} parent=1 // pred_check
      %p22 = pneg %p21
    $region19: #{tpu_custom_call.1} parent=1 // pred_check_branch
      %24 = sbr.rel (%p22) target = $region21
    $region20: #{tpu_custom_call.1} parent=1 // pred_region
      %v25 = vld [vmem:[%s0] sm:$0xff]
      %v26 = vmul.f32 %v25, %v25
      %vm27 = vcmask 261120
      %v28 = vsel %vm27, %v26, 0.0
      %29 = vadd.xlane.f32.xlu0 %v28
      %v30 = vpop.xlane.xlu0 %29
      %vm31 = vcmask 7168
      %32 = vst.msk [vmem:[#allocation2] sm:$0xff] %vm31, %v30
      %33 = vst [vmem:[#allocation3] sm:$0xff] 0.0
      %34 = vst [vmem:[#allocation5] sm:$0xff] 0
    $region21: #{tpu_custom_call.1} parent=1 // pred_fallthru
      _
    %v35 = vld [vmem:[%s0] sm:$0xff]
    %v36 = vld [vmem:[%s1] sm:$0xff]
    %v37 = vld [vmem:[%s1 + $0x8] sm:$0xff]
    %v38 = vld [vmem:[%s1 + $0x10] sm:$0xff]
    %v39 = vld [vmem:[%s1 + $0x18] sm:$0xff]
    %v40 = vld [vmem:[%s1 + $0x20] sm:$0xff]
    %v41 = vld [vmem:[%s1 + $0x28] sm:$0xff]
    %v42 = vld [vmem:[%s1 + $0x30] sm:$0xff]
    %v43 = vld [vmem:[%s1 + $0x38] sm:$0xff]
    %v44 = vld [vmem:[%s1 + $0x40] sm:$0xff]
    %v45 = vld [vmem:[%s1 + $0x48] sm:$0xff]
    %v46 = vld [vmem:[%s1 + $0x50] sm:$0xff]
    %v47 = vld [vmem:[%s1 + $0x58] sm:$0xff]
    %v48 = vld [vmem:[%s1 + $0x60] sm:$0xff]
    %v49 = vld [vmem:[%s1 + $0x68] sm:$0xff]
    %v50 = vld [vmem:[%s1 + $0x70] sm:$0xff]
    %v51 = vld [vmem:[%s1 + $0x78] sm:$0xff]
    %v52 = vld [vmem:[%s2] sm:$0x1]
    %v53 = vld [vmem:[%s3] sm:$0xff]
    %vm54 = vcmask 261120
    %v56 = vsel %vm54, %v35, 0
    %v59 = vsel %vm54, %v36, 0
    %v62 = vsel %vm54, %v37, 0
    %v65 = vsel %vm54, %v38, 0
    %v68 = vsel %vm54, %v39, 0
    %v71 = vsel %vm54, %v40, 0
    %v74 = vsel %vm54, %v41, 0
    %v77 = vsel %vm54, %v42, 0
    %v80 = vsel %vm54, %v43, 0
    %v83 = vsel %vm54, %v44, 0
    %v86 = vsel %vm54, %v45, 0
    %v89 = vsel %vm54, %v46, 0
    %v92 = vsel %vm54, %v47, 0
    %v95 = vsel %vm54, %v48, 0
    %v98 = vsel %vm54, %v49, 0
    %v101 = vsel %vm54, %v50, 0
    %v104 = vsel %vm54, %v51, 0
    %106 = vmatpush.xpose.msra.mxu0 %v104
    %107 = vmatpush.xpose.msra.mxu0 %v101
    %108 = vmatpush.xpose.msra.mxu0 %v98
    %109 = vmatpush.xpose.msra.mxu0 %v95
    %110 = vmatpush.xpose.msra.mxu0 %v92
    %111 = vmatpush.xpose.msra.mxu0 %v89
    %112 = vmatpush.xpose.msra.mxu0 %v86
    %113 = vmatpush.xpose.msra.mxu0 %v83
    %114 = vmatpush.xpose.msra.mxu0 %v80
    %115 = vmatpush.xpose.msra.mxu0 %v77
    %116 = vmatpush.xpose.msra.mxu0 %v74
    %117 = vmatpush.xpose.msra.mxu0 %v71
    %118 = vmatpush.xpose.msra.mxu0 %v68
    %119 = vmatpush.xpose.msra.mxu0 %v65
    %120 = vmatpush.xpose.msra.mxu0 %v62
    %121 = vmatpush.xpose.msra.mxu0 %v59
    %122 = vmatmul.f32.gmra.mxu0 %v56
    %v123 = vpop.f32.mrf.mxu0
    %v124 = vadd.f32 0.0, %v123
    %125 = vdwg.mxu0
    %v126 = vld [vmem:[#allocation2] sm:$0xff]
    %128 = vset.pattern.permute.xlu0 0
    %129 = vperm.xlu0 %128, %v126
    %v130 = vpop.permute.xlu0 %129
    %v133 = vperm.slane %v52, 0
    %v135 = vadd.f32 %v130, %v133
    %v136 = vmul.f32 %v124, 2.0
    %v137 = vsub.f32 %v135, %v136
    %v138 = vlaneseq
    %v139 = vand.u32 %v138, 127
    %s140 = smul.u32 0, 128
    %v141 = vstv %s140
    %v142 = vsub.s32 %v53, %v141
    %143 = vset.pattern.permute.xlu0 0
    %144 = vperm.xlu0 %143, %v142
    %v145 = vpop.permute.xlu0 %144
    %vm146 = vcmp.eq.s32.totalorder %v145, %v139
    %v147 = vsel %vm146, 0.0, %v137
    %v148 = vmax.f32 %v147, 1e-12
    %v149 = vmin.f32 %v148, 1e+12
    %vm150 = vcmp.ne.f32.partialorder %v147, 0.0
    %s151 = ssub.s32 16, %s140
    %v152 = vstv %s151
    %vm153 = vcmp.lt.s32.totalorder %v139, %v152
    %v154 = vsel %vm153, %v149, 0.0
    %vm155 = vmand %vm150, %vm153
    %v156 = vsel %vm155, 1, 0
    %v157 = vld [vmem:[#allocation3] sm:$0xff]
    %v158 = vld [vmem:[#allocation5] sm:$0xff]
    %v159 = vadd.f32 %v157, %v154
    %v160 = vadd.s32 %v158, %v156
    %161 = vst [vmem:[#allocation3] sm:$0xff] %v159
    %162 = vst [vmem:[#allocation5] sm:$0xff] %v160
    // Predicated region
    $region22: #{tpu_custom_call.1} parent=1 // pred_check
      _
    $region23: #{tpu_custom_call.1} parent=1 // pred_check_branch
      %164 = sbr.rel (0) target = $region25
    $region24: #{tpu_custom_call.1} parent=1 // pred_region
      %166 = vsyncadd [#allocation4], 0
      %s168 = sshll.u32 [#allocation3], 4
      %s169 = int_to_ptr.vmem [resolvable:$true] %s168
      %s170 = sshll.u32 %s4, 4
      %s171 = int_to_ptr.hbm [resolvable:$true] %s170
      %173 = dma.vmem_to_hbm [thread:$0]  %s169, 128, %s171, [#allocation4]
    $region25: #{tpu_custom_call.1} parent=1 // pred_fallthru
      _
    // Predicated region
    $region26: #{tpu_custom_call.1} parent=1 // pred_check
      _
    $region27: #{tpu_custom_call.1} parent=1 // pred_check_branch
      %175 = sbr.rel (0) target = $region29
    $region28: #{tpu_custom_call.1} parent=1 // pred_region
      %177 = vsyncadd [#allocation6], 0
      %s179 = sshll.u32 [#allocation5], 4
      %s180 = int_to_ptr.vmem [resolvable:$true] %s179
      %s181 = sshll.u32 %s5, 4
      %s182 = int_to_ptr.hbm [resolvable:$true] %s181
      %184 = dma.vmem_to_hbm [thread:$0]  %s180, 128, %s182, [#allocation6]
    $region29: #{tpu_custom_call.1} parent=1 // pred_fallthru
      _
    // Predicated region
    $region30: #{tpu_custom_call.1} parent=1 // pred_check
      _
    $region31: #{tpu_custom_call.1} parent=1 // pred_check_branch
      %186 = sbr.rel (0) target = $region33
    $region32: #{tpu_custom_call.1} parent=1 // pred_region
      %188 = dma.done [#allocation4], 128
    $region33: #{tpu_custom_call.1} parent=1 // pred_fallthru
      _
    // Predicated region
    $region34: #{tpu_custom_call.1} parent=1 // pred_check
      _
    $region35: #{tpu_custom_call.1} parent=1 // pred_check_branch
      %190 = sbr.rel (0) target = $region37
    $region36: #{tpu_custom_call.1} parent=1 // pred_region
      %192 = dma.done [#allocation6], 128
    $region37: #{tpu_custom_call.1} parent=1 // pred_fallthru
      _
    %193 = vsyncpa [#allocation4], 1
    %194 = vsyncpa [#allocation6], 1

</llo_original>
